<compile_context>
chip_gen: v7x
topology: tpu7x:2x2x1
jax: 0.10.0
libtpu: 0.0.40
codegen_flags: <defaults>
</compile_context>

<pallas_src>
import math

import jax
import jax.numpy as jnp
from jax.experimental import pallas as pl
from jax.experimental.pallas import tpu as pltpu

MINUS_INF = -100000000.0


# ----------------------------- Pallas kernel ------------------------------ #
def parser_head_kernel(x_ref, w_ref, b_ref, m_ref, tgt_ref, tagoh_ref, child_ref,
                       probs_ref, tagp_ref, loss_ref):
    """One batch element per grid step.

    x_ref:     (H, S)   bf16  encoded text (transposed: words on lanes)
    w_ref:     (T+6, H) bf16  fused projections (T tag rows, then 6 head rows)
    b_ref:     (T+6, 1) f32   fused biases
    m_ref:     (6, S)   f32   per-head masks (already ANDed with word_mask)
    tgt_ref:   (3, S)   f32   one-hot targets: parent / parent_start / parent_end
    tagoh_ref: (T, 1)   f32   one-hot dep-tag target
    child_ref: (3, S)   f32   child / child_start / child_end targets
    probs_ref: (6, S)   f32   rows 0-2 softmax probs, rows 3-5 sigmoid probs
    tagp_ref:  (T, S)   f32   tag softmax probs (softmax over T)
    loss_ref:  (8, 1)   f32   [arc, start, end, tag, ch_num, chs_num, che_num, ch_den]
    """
    T = tagp_ref.shape[0]

    # One fused MXU matmul -> every head score for this batch element.
    scores = (jnp.dot(w_ref[...], x_ref[...], preferred_element_type=jnp.float32)
              + b_ref[...])                                      # (T+6, S) f32

    tag_scores = scores[:T, :]                                   # (T, S) unmasked
    head_scores = scores[T:, :]                                  # (6, S)

    masks = m_ref[...]                                           # (6, S)
    masked = jnp.where(masks > 0.0, head_scores, MINUS_INF)      # one select / head

    sm_scores = masked[:3, :]                                    # parent / start / end
    sg_scores = masked[3:, :]                                    # child heads

    # Softmax heads: one max/exp/sum pass gives both log-probs and probs.
    mx = jnp.max(sm_scores, axis=-1, keepdims=True)              # (3, 1)
    ex = jnp.exp(sm_scores - mx)
    den = jnp.sum(ex, axis=-1, keepdims=True)                    # (3, 1)
    sm_logp = (sm_scores - mx) - jnp.log(den)                    # log-probs
    probs_ref[0:3, :] = ex * pl.reciprocal(den, approx=True)

    # Sigmoid heads: stable form (finite at the -1e8 masked positions); the
    # exp(-|s|) term is shared with the BCE below.
    e_neg = jnp.exp(-jnp.abs(sg_scores))
    one_p = 1.0 + e_neg
    probs_ref[3:6, :] = (jnp.exp(jnp.minimum(sg_scores, 0.0))
                         * pl.reciprocal(one_p, approx=True))

    # Tag softmax over the label axis (sublanes); probs from the same pass.
    tmx = jnp.max(tag_scores, axis=0, keepdims=True)             # (1, S)
    tex = jnp.exp(tag_scores - tmx)
    tden = jnp.sum(tex, axis=0, keepdims=True)                   # (1, S)
    tag_logp = (tag_scores - tmx) - jnp.log(tden)
    tagp_ref[...] = tex * pl.reciprocal(tden, approx=True)

    # ----------------- per-batch loss partials ----------------- #
    tgt = tgt_ref[...]                                           # (3, S)
    # arc / start / end NLL in one stacked lane-reduction
    ce3 = -jnp.sum(sm_logp * tgt, axis=-1, keepdims=True)        # (3, 1)

    # dep-tag NLL at the gold parent position (select via the parent one-hot)
    par_row = tgt[0:1, :]                                        # (1, S)
    tag_col = tagoh_ref[...]                                     # (T, 1)
    sel = jnp.sum(tag_logp * tag_col, axis=0, keepdims=True)     # (1, S)
    tag_nll = -jnp.sum(sel * par_row, axis=-1, keepdims=True)    # (1, 1)

    # Stacked BCE-with-logits for the 3 child heads (masked partial sums).
    y = child_ref[...]                                           # (3, S)
    chm = masks[3:4, :]                                          # (1, S) child mask
    bce = (jnp.maximum(sg_scores, 0.0) - sg_scores * y + jnp.log(one_p))
    bce_num = jnp.sum(bce * chm, axis=-1, keepdims=True)         # (3, 1)
    ch_den = jnp.sum(chm, axis=-1, keepdims=True)                # (1, 1)

    loss_ref[0:3, :] = ce3
    loss_ref[3:4, :] = tag_nll
    loss_ref[4:7, :] = bce_num
    loss_ref[7:8, :] = ch_den


# ------------------------------ JAX wrapper ------------------------------- #
def run_parser_head(encoded, w_tag, b_tag, w_heads, b_heads,
                    word_mask, parent_mask, parent_start_mask, parent_end_mask,
                    child_mask, parent_idxs, parent_tags, parent_starts,
                    parent_ends, child_idxs, child_starts, child_ends):
    f32, bf16 = jnp.float32, jnp.bfloat16
    B, S, H = encoded.shape
    T = w_tag.shape[1]
    T6 = T + 6

    # ---- layout plumbing (cheap XLA ops outside the kernel) ----
    x_t = jnp.transpose(encoded, (0, 2, 1)).astype(bf16)                  # (B, H, S)
    w_all = jnp.concatenate([w_tag, w_heads], axis=1).T.astype(bf16)      # (T+6, H)
    b_all = jnp.concatenate([b_tag, b_heads], axis=0).astype(f32)[:, None]  # (T+6, 1)

    wm = word_mask.astype(f32)
    mask6 = jnp.stack(
        [parent_mask.astype(f32), parent_start_mask.astype(f32),
         parent_end_mask.astype(f32), child_mask.astype(f32),
         child_mask.astype(f32), child_mask.astype(f32)], axis=1) * wm[:, None, :]

    tgt3 = jnp.stack([jax.nn.one_hot(parent_idxs, S, dtype=f32),
                      jax.nn.one_hot(parent_starts, S, dtype=f32),
                      jax.nn.one_hot(parent_ends, S, dtype=f32)], axis=1)  # (B, 3, S)
    tag_oh = jax.nn.one_hot(parent_tags, T, dtype=f32)[:, :, None]         # (B, T, 1)
    child3 = jnp.stack([child_idxs, child_starts, child_ends],
                       axis=1).astype(f32)                                  # (B, 3, S)

    out_shape = (
        jax.ShapeDtypeStruct((B, 6, S), f32),     # packed head probs
        jax.ShapeDtypeStruct((B, T, S), f32),     # tag probs (transposed)
        jax.ShapeDtypeStruct((B, 8, 1), f32),     # per-batch loss partials
    )

    in_specs = [
        pl.BlockSpec((None, H, S), lambda b: (b, 0, 0)),    # x_t
        pl.BlockSpec((T6, H), lambda b: (0, 0)),            # fused weights (resident)
        pl.BlockSpec((T6, 1), lambda b: (0, 0)),            # fused biases
        pl.BlockSpec((None, 6, S), lambda b: (b, 0, 0)),    # masks
        pl.BlockSpec((None, 3, S), lambda b: (b, 0, 0)),    # softmax targets
        pl.BlockSpec((None, T, 1), lambda b: (b, 0, 0)),    # tag one-hot
        pl.BlockSpec((None, 3, S), lambda b: (b, 0, 0)),    # child targets
    ]
    out_specs = (
        pl.BlockSpec((None, 6, S), lambda b: (b, 0, 0)),
        pl.BlockSpec((None, T, S), lambda b: (b, 0, 0)),
        pl.BlockSpec((None, 8, 1), lambda b: (b, 0, 0)),
    )

    # NOTE: for real BERT shapes (H ~ 768-1024, S in the hundreds) add a second
    # row-tile grid axis over S and re-derive tiles against the 64 MiB v7x VMEM.
    probs6, tagp_t, loss_parts = pl.pallas_call(
        parser_head_kernel,
        out_shape=out_shape,
        grid=(B,),
        in_specs=in_specs,
        out_specs=out_specs,
        compiler_params=pltpu.CompilerParams(
            dimension_semantics=("parallel",),
            vmem_limit_bytes=32 * 1024 * 1024,
        ),
    )(x_t, w_all, b_all, mask6, tgt3, tag_oh, child3)

    # ---- finish the tiny cross-batch reductions in plain JAX ----
    parts = loss_parts[:, :, 0]                   # (B, 8)
    inv_b = 1.0 / B
    arc_loss = jnp.sum(parts[:, 0]) * inv_b
    start_loss = jnp.sum(parts[:, 1]) * inv_b
    end_loss = jnp.sum(parts[:, 2]) * inv_b
    tag_loss = jnp.sum(parts[:, 3]) * inv_b
    ch_den = jnp.sum(parts[:, 7]) + 1e-8
    child_loss = jnp.sum(parts[:, 4]) / ch_den
    child_start_loss = jnp.sum(parts[:, 5]) / ch_den
    child_end_loss = jnp.sum(parts[:, 6]) / ch_den

    parent_probs = probs6[:, 0, :]
    parent_start_probs = probs6[:, 1, :]
    parent_end_probs = probs6[:, 2, :]
    child_probs = probs6[:, 3, :]
    child_start_probs = probs6[:, 4, :]
    child_end_probs = probs6[:, 5, :]
    parent_tag_probs = jnp.transpose(tagp_t, (0, 2, 1))        # (B, S, T)

    # Same ordering as the PyTorch module's output tuple.
    return (parent_probs, parent_tag_probs, parent_start_probs, parent_end_probs,
            child_probs, child_start_probs, child_end_probs,
            arc_loss, tag_loss, start_loss, end_loss,
            child_loss, child_start_loss, child_end_loss)


# -------- plain-JAX glue: "BERT" embedding + batched_span_select pool ------ #
def get_word_embedding(emb_table, token_ids, offsets, max_span):
    """Mimics get_word_embedding(): wordpiece embeddings -> word-level mean pool."""
    embeddings = emb_table[token_ids]                        # [B, P, H]
    cls_emb = embeddings[:, 0, :]
    starts = offsets[..., 0]
    ends = offsets[..., 1]
    rng = jnp.arange(max_span)
    idxs = starts[..., None] + rng[None, None, :]            # [B, W, M]
    span_mask = (idxs <= ends[..., None])
    idxs_c = jnp.clip(idxs, 0, embeddings.shape[1] - 1)
    b_idx = jnp.arange(embeddings.shape[0])[:, None, None]
    span_emb = embeddings[b_idx, idxs_c]                     # [B, W, M, H]
    m = span_mask[..., None].astype(embeddings.dtype)
    span_emb = span_emb * m
    s = span_emb.sum(axis=2)
    l = m.sum(axis=2)
    orig = s / jnp.clip(l, 1.0, None)
    orig = jnp.where(l == 0, 0.0, orig)
    return cls_emb, orig


def xavier_uniform(key, fan_in, fan_out, shape):
    bound = math.sqrt(6.0 / (fan_in + fan_out))
    return jax.random.uniform(key, shape, jnp.float32, -bound, bound)


# --------------------------------- main ----------------------------------- #
if __name__ == "__main__":
    B, P, W, H, T = 2, 12, 8, 32, 8       # batch, wordpieces, words, hidden, dep labels
    VOCAB, MAX_SPAN = 100, 3

    key = jax.random.PRNGKey(0)
    keys = jax.random.split(key, 16)

    # deterministic parameters (shapes per module __init__; xavier/zero init)
    emb_table = 0.02 * jax.random.normal(keys[0], (VOCAB, H), jnp.float32)
    w_tag = xavier_uniform(keys[1], H, T, (H, T))            # parent_tag_feedforward
    b_tag = jnp.zeros((T,), jnp.float32)
    hkeys = jax.random.split(keys[2], 6)
    # order: parent, parent_start, parent_end, child, child_start, child_end (all H->1)
    w_heads = jnp.concatenate(
        [xavier_uniform(hkeys[i], H, 1, (H, 1)) for i in range(6)], axis=1)
    b_heads = jnp.zeros((6,), jnp.float32)

    # deterministic example inputs
    token_ids = jax.random.randint(keys[3], (B, P), 0, VOCAB)
    starts = jnp.broadcast_to(1 + jnp.arange(W), (B, W)).astype(jnp.int32)
    ends = (starts + (jnp.arange(W) % 2)).astype(jnp.int32)
    offsets = jnp.stack([starts, ends], axis=-1)             # [B, W, 2]
    word_mask = jnp.ones((B, W), dtype=bool).at[1, W - 1].set(False)
    parent_mask = jax.random.bernoulli(keys[4], 0.9, (B, W))
    parent_start_mask = jax.random.bernoulli(keys[5], 0.9, (B, W))
    parent_end_mask = jax.random.bernoulli(keys[6], 0.9, (B, W))
    child_mask = jax.random.bernoulli(keys[7], 0.9, (B, W))
    parent_idxs = jax.random.randint(keys[8], (B,), 0, W)
    parent_tags = jax.random.randint(keys[9], (B,), 0, T)
    parent_starts = jax.random.randint(keys[10], (B,), 0, W)
    parent_ends = jax.random.randint(keys[11], (B,), 0, W)
    child_idxs = jax.random.bernoulli(keys[12], 0.3, (B, W))
    child_starts = jax.random.bernoulli(keys[13], 0.3, (B, W))
    child_ends = jax.random.bernoulli(keys[14], 0.3, (B, W))

    # embedding + span pooling (pos_dim=0, additional_layer=0, eval dropout)
    _cls, encoded_text = get_word_embedding(emb_table, token_ids, offsets, MAX_SPAN)

    outs = run_parser_head(
        encoded_text, w_tag, b_tag, w_heads, b_heads,
        word_mask, parent_mask, parent_start_mask, parent_end_mask, child_mask,
        parent_idxs, parent_tags, parent_starts, parent_ends,
        child_idxs, child_starts, child_ends)

    jax.block_until_ready(outs)
    print("KERNEL_OK")
</pallas_src>

<mosaic_0001>
module attributes {stable_mosaic.version = 11 : i64} {
  func.func @parser_head_kernel(%arg0: i32, %arg1: memref<1x32x8xbf16, #tpu.memory_space<vmem>>, %arg2: memref<14x32xbf16, #tpu.memory_space<vmem>>, %arg3: memref<14x1xf32, #tpu.memory_space<vmem>>, %arg4: memref<1x6x8xf32, #tpu.memory_space<vmem>>, %arg5: memref<1x3x8xf32, #tpu.memory_space<vmem>>, %arg6: memref<1x8x1xf32, #tpu.memory_space<vmem>>, %arg7: memref<1x3x8xf32, #tpu.memory_space<vmem>>, %arg8: memref<1x6x8xf32, #tpu.memory_space<vmem>>, %arg9: memref<1x8x8xf32, #tpu.memory_space<vmem>>, %arg10: memref<1x8x1xf32, #tpu.memory_space<vmem>>) attributes {dimension_semantics = [#tpu.dimension_semantics<parallel>], iteration_bounds = array<i64: 2>, scalar_prefetch = 0 : i64, scratch_operands = 0 : i64, tpu.core_type = #tpu.core_type<tc>, window_params = [{transform_indices = @transform_0, window_bounds = array<i64: 1, 32, 8>}, {pipeline_mode = #tpu.pipeline_mode<synchronous>, transform_indices = @transform_1, window_bounds = array<i64: 14, 32>}, {pipeline_mode = #tpu.pipeline_mode<synchronous>, transform_indices = @transform_2, window_bounds = array<i64: 14, 1>}, {transform_indices = @transform_3, window_bounds = array<i64: 1, 6, 8>}, {transform_indices = @transform_4, window_bounds = array<i64: 1, 3, 8>}, {transform_indices = @transform_5, window_bounds = array<i64: 1, 8, 1>}, {transform_indices = @transform_6, window_bounds = array<i64: 1, 3, 8>}, {transform_indices = @transform_7, window_bounds = array<i64: 1, 6, 8>}, {transform_indices = @transform_8, window_bounds = array<i64: 1, 8, 8>}, {transform_indices = @transform_9, window_bounds = array<i64: 1, 8, 1>}]} {
    %c0 = arith.constant 0 : index
    %c0_0 = arith.constant 0 : index
    %0 = vector.load %arg2[%c0, %c0_0] : memref<14x32xbf16, #tpu.memory_space<vmem>>, vector<14x32xbf16>
    %c0_1 = arith.constant 0 : index
    %c0_2 = arith.constant 0 : index
    %c0_3 = arith.constant 0 : index
    %1 = vector.load %arg1[%c0_1, %c0_2, %c0_3] : memref<1x32x8xbf16, #tpu.memory_space<vmem>>, vector<1x32x8xbf16>
    %2 = vector.shape_cast %1 : vector<1x32x8xbf16> to vector<32x8xbf16>
    %cst = arith.constant dense<0.000000e+00> : vector<14x8xf32>
    %3 = tpu.matmul %0, %2, %cst {dimension_numbers = #tpu.dot_dimension_numbers<[1], [0], [0], [1], [0, 0, 1, 1], [], []>} : vector<14x32xbf16>, vector<32x8xbf16>, vector<14x8xf32> -> vector<14x8xf32>
    %c0_4 = arith.constant 0 : index
    %c0_5 = arith.constant 0 : index
    %4 = vector.load %arg3[%c0_4, %c0_5] : memref<14x1xf32, #tpu.memory_space<vmem>>, vector<14x1xf32>
    %5 = vector.broadcast %4 : vector<14x1xf32> to vector<14x8xf32>
    %6 = arith.addf %3, %5 : vector<14x8xf32>
    %7 = vector.extract_strided_slice %6 {offsets = [0, 0], sizes = [8, 8], strides = [1, 1]} : vector<14x8xf32> to vector<8x8xf32>
    %8 = vector.extract_strided_slice %6 {offsets = [8, 0], sizes = [6, 8], strides = [1, 1]} : vector<14x8xf32> to vector<6x8xf32>
    %c0_6 = arith.constant 0 : index
    %c0_7 = arith.constant 0 : index
    %c0_8 = arith.constant 0 : index
    %9 = vector.load %arg4[%c0_6, %c0_7, %c0_8] : memref<1x6x8xf32, #tpu.memory_space<vmem>>, vector<1x6x8xf32>
    %10 = vector.shape_cast %9 : vector<1x6x8xf32> to vector<6x8xf32>
    %cst_9 = arith.constant 0.000000e+00 : f32
    %11 = vector.broadcast %cst_9 : f32 to vector<6x8xf32>
    %12 = arith.cmpf ogt, %10, %11 : vector<6x8xf32>
    %cst_10 = arith.constant -1.000000e+08 : f32
    %13 = vector.broadcast %cst_10 : f32 to vector<6x8xf32>
    %14 = arith.select %12, %8, %13 : vector<6x8xi1>, vector<6x8xf32>
    %15 = vector.extract_strided_slice %14 {offsets = [0, 0], sizes = [3, 8], strides = [1, 1]} : vector<6x8xf32> to vector<3x8xf32>
    %16 = vector.extract_strided_slice %14 {offsets = [3, 0], sizes = [3, 8], strides = [1, 1]} : vector<6x8xf32> to vector<3x8xf32>
    %cst_11 = arith.constant dense<0xFF800000> : vector<3xf32>
    %17 = vector.multi_reduction <maximumf>, %15, %cst_11 [1] : vector<3x8xf32> to vector<3xf32>
    %18 = vector.shape_cast %17 : vector<3xf32> to vector<3x1xf32>
    %19 = vector.broadcast %18 : vector<3x1xf32> to vector<3x8xf32>
    %20 = arith.subf %15, %19 : vector<3x8xf32>
    %21 = math.exp %20 : vector<3x8xf32>
    %cst_12 = arith.constant dense<0.000000e+00> : vector<3xf32>
    %22 = vector.multi_reduction <add>, %21, %cst_12 [1] : vector<3x8xf32> to vector<3xf32>
    %23 = vector.shape_cast %22 : vector<3xf32> to vector<3x1xf32>
    %24 = vector.broadcast %18 : vector<3x1xf32> to vector<3x8xf32>
    %25 = arith.subf %15, %24 : vector<3x8xf32>
    %26 = math.log %23 : vector<3x1xf32>
    %27 = vector.broadcast %26 : vector<3x1xf32> to vector<3x8xf32>
    %28 = arith.subf %25, %27 : vector<3x8xf32>
    %29 = tpu.reciprocal %23 {approx = true} : vector<3x1xf32> -> vector<3x1xf32>
    %30 = vector.broadcast %29 : vector<3x1xf32> to vector<3x8xf32>
    %31 = arith.mulf %21, %30 : vector<3x8xf32>
    %c0_13 = arith.constant 0 : index
    %c0_14 = arith.constant 0 : index
    %c0_15 = arith.constant 0 : index
    %32 = vector.load %arg8[%c0_13, %c0_14, %c0_15] : memref<1x6x8xf32, #tpu.memory_space<vmem>>, vector<1x3x8xf32>
    %33 = vector.shape_cast %32 : vector<1x3x8xf32> to vector<3x8xf32>
    %34 = vector.shape_cast %31 : vector<3x8xf32> to vector<1x3x8xf32>
    tpu.vector_store %arg8[%c0_13, %c0_14, %c0_15], %34 {strides = array<i32>} : memref<1x6x8xf32, #tpu.memory_space<vmem>>, vector<1x3x8xf32>,
    %35 = math.absf %16 : vector<3x8xf32>
    %cst_16 = arith.constant 0.000000e+00 : f32
    %36 = vector.broadcast %cst_16 : f32 to vector<3x8xf32>
    %37 = arith.subf %36, %35 : vector<3x8xf32>
    %38 = math.exp %37 : vector<3x8xf32>
    %cst_17 = arith.constant 1.000000e+00 : f32
    %39 = vector.broadcast %cst_17 : f32 to vector<3x8xf32>
    %40 = arith.addf %39, %38 : vector<3x8xf32>
    %cst_18 = arith.constant 0.000000e+00 : f32
    %41 = vector.broadcast %cst_18 : f32 to vector<3x8xf32>
    %42 = arith.minimumf %16, %41 : vector<3x8xf32>
    %43 = math.exp %42 : vector<3x8xf32>
    %44 = tpu.reciprocal %40 {approx = true} : vector<3x8xf32> -> vector<3x8xf32>
    %45 = arith.mulf %43, %44 : vector<3x8xf32>
    %c0_19 = arith.constant 0 : index
    %c3 = arith.constant 3 : index
    %c0_20 = arith.constant 0 : index
    %46 = vector.load %arg8[%c0_19, %c3, %c0_20] : memref<1x6x8xf32, #tpu.memory_space<vmem>>, vector<1x3x8xf32>
    %47 = vector.shape_cast %46 : vector<1x3x8xf32> to vector<3x8xf32>
    %48 = vector.shape_cast %45 : vector<3x8xf32> to vector<1x3x8xf32>
    tpu.vector_store %arg8[%c0_19, %c3, %c0_20], %48 {strides = array<i32>} : memref<1x6x8xf32, #tpu.memory_space<vmem>>, vector<1x3x8xf32>,
    %cst_21 = arith.constant dense<0xFF800000> : vector<8xf32>
    %49 = vector.multi_reduction <maximumf>, %7, %cst_21 [0] : vector<8x8xf32> to vector<8xf32>
    %50 = vector.shape_cast %49 : vector<8xf32> to vector<1x8xf32>
    %51 = vector.broadcast %50 : vector<1x8xf32> to vector<8x8xf32>
    %52 = arith.subf %7, %51 : vector<8x8xf32>
    %53 = math.exp %52 : vector<8x8xf32>
    %cst_22 = arith.constant dense<0.000000e+00> : vector<8xf32>
    %54 = vector.multi_reduction <add>, %53, %cst_22 [0] : vector<8x8xf32> to vector<8xf32>
    %55 = vector.shape_cast %54 : vector<8xf32> to vector<1x8xf32>
    %56 = vector.broadcast %50 : vector<1x8xf32> to vector<8x8xf32>
    %57 = arith.subf %7, %56 : vector<8x8xf32>
    %58 = math.log %55 : vector<1x8xf32>
    %59 = vector.broadcast %58 : vector<1x8xf32> to vector<8x8xf32>
    %60 = arith.subf %57, %59 : vector<8x8xf32>
    %61 = tpu.reciprocal %55 {approx = true} : vector<1x8xf32> -> vector<1x8xf32>
    %62 = vector.broadcast %61 : vector<1x8xf32> to vector<8x8xf32>
    %63 = arith.mulf %53, %62 : vector<8x8xf32>
    %c0_23 = arith.constant 0 : index
    %c0_24 = arith.constant 0 : index
    %c0_25 = arith.constant 0 : index
    %64 = vector.load %arg9[%c0_23, %c0_24, %c0_25] : memref<1x8x8xf32, #tpu.memory_space<vmem>>, vector<1x8x8xf32>
    %65 = vector.shape_cast %64 : vector<1x8x8xf32> to vector<8x8xf32>
    %66 = vector.shape_cast %63 : vector<8x8xf32> to vector<1x8x8xf32>
    tpu.vector_store %arg9[%c0_23, %c0_24, %c0_25], %66 {strides = array<i32>} : memref<1x8x8xf32, #tpu.memory_space<vmem>>, vector<1x8x8xf32>,
    %c0_26 = arith.constant 0 : index
    %c0_27 = arith.constant 0 : index
    %c0_28 = arith.constant 0 : index
    %67 = vector.load %arg5[%c0_26, %c0_27, %c0_28] : memref<1x3x8xf32, #tpu.memory_space<vmem>>, vector<1x3x8xf32>
    %68 = vector.shape_cast %67 : vector<1x3x8xf32> to vector<3x8xf32>
    %69 = arith.mulf %28, %68 : vector<3x8xf32>
    %cst_29 = arith.constant dense<0.000000e+00> : vector<3xf32>
    %70 = vector.multi_reduction <add>, %69, %cst_29 [1] : vector<3x8xf32> to vector<3xf32>
    %71 = vector.shape_cast %70 : vector<3xf32> to vector<3x1xf32>
    %cst_30 = arith.constant 0.000000e+00 : f32
    %72 = vector.broadcast %cst_30 : f32 to vector<3x1xf32>
    %73 = arith.subf %72, %71 : vector<3x1xf32>
    %74 = vector.extract_strided_slice %68 {offsets = [0, 0], sizes = [1, 8], strides = [1, 1]} : vector<3x8xf32> to vector<1x8xf32>
    %c0_31 = arith.constant 0 : index
    %c0_32 = arith.constant 0 : index
    %c0_33 = arith.constant 0 : index
    %75 = vector.load %arg6[%c0_31, %c0_32, %c0_33] : memref<1x8x1xf32, #tpu.memory_space<vmem>>, vector<1x8x1xf32>
    %76 = vector.shape_cast %75 : vector<1x8x1xf32> to vector<8x1xf32>
    %77 = vector.broadcast %76 : vector<8x1xf32> to vector<8x8xf32>
    %78 = arith.mulf %60, %77 : vector<8x8xf32>
    %cst_34 = arith.constant dense<0.000000e+00> : vector<8xf32>
    %79 = vector.multi_reduction <add>, %78, %cst_34 [0] : vector<8x8xf32> to vector<8xf32>
    %80 = vector.shape_cast %79 : vector<8xf32> to vector<1x8xf32>
    %81 = arith.mulf %80, %74 : vector<1x8xf32>
    %cst_35 = arith.constant dense<0.000000e+00> : vector<1xf32>
    %82 = vector.multi_reduction <add>, %81, %cst_35 [1] : vector<1x8xf32> to vector<1xf32>
    %83 = vector.shape_cast %82 : vector<1xf32> to vector<1x1xf32>
    %cst_36 = arith.constant 0.000000e+00 : f32
    %84 = vector.broadcast %cst_36 : f32 to vector<1x1xf32>
    %85 = arith.subf %84, %83 : vector<1x1xf32>
    %c0_37 = arith.constant 0 : index
    %c0_38 = arith.constant 0 : index
    %c0_39 = arith.constant 0 : index
    %86 = vector.load %arg7[%c0_37, %c0_38, %c0_39] : memref<1x3x8xf32, #tpu.memory_space<vmem>>, vector<1x3x8xf32>
    %87 = vector.shape_cast %86 : vector<1x3x8xf32> to vector<3x8xf32>
    %88 = vector.extract_strided_slice %10 {offsets = [3, 0], sizes = [1, 8], strides = [1, 1]} : vector<6x8xf32> to vector<1x8xf32>
    %cst_40 = arith.constant 0.000000e+00 : f32
    %89 = vector.broadcast %cst_40 : f32 to vector<3x8xf32>
    %90 = arith.maximumf %16, %89 : vector<3x8xf32>
    %91 = arith.mulf %16, %87 : vector<3x8xf32>
    %92 = arith.subf %90, %91 : vector<3x8xf32>
    %93 = math.log %40 : vector<3x8xf32>
    %94 = arith.addf %92, %93 : vector<3x8xf32>
    %95 = vector.broadcast %88 : vector<1x8xf32> to vector<3x8xf32>
    %96 = arith.mulf %94, %95 : vector<3x8xf32>
    %cst_41 = arith.constant dense<0.000000e+00> : vector<3xf32>
    %97 = vector.multi_reduction <add>, %96, %cst_41 [1] : vector<3x8xf32> to vector<3xf32>
    %98 = vector.shape_cast %97 : vector<3xf32> to vector<3x1xf32>
    %cst_42 = arith.constant dense<0.000000e+00> : vector<1xf32>
    %99 = vector.multi_reduction <add>, %88, %cst_42 [1] : vector<1x8xf32> to vector<1xf32>
    %100 = vector.shape_cast %99 : vector<1xf32> to vector<1x1xf32>
    %c0_43 = arith.constant 0 : index
    %c0_44 = arith.constant 0 : index
    %c0_45 = arith.constant 0 : index
    %101 = vector.load %arg10[%c0_43, %c0_44, %c0_45] : memref<1x8x1xf32, #tpu.memory_space<vmem>>, vector<1x3x1xf32>
    %102 = vector.shape_cast %101 : vector<1x3x1xf32> to vector<3x1xf32>
    %103 = vector.shape_cast %73 : vector<3x1xf32> to vector<1x3x1xf32>
    tpu.vector_store %arg10[%c0_43, %c0_44, %c0_45], %103 {strides = array<i32>} : memref<1x8x1xf32, #tpu.memory_space<vmem>>, vector<1x3x1xf32>,
    %c0_46 = arith.constant 0 : index
    %c3_47 = arith.constant 3 : index
    %c0_48 = arith.constant 0 : index
    %104 = vector.load %arg10[%c0_46, %c3_47, %c0_48] : memref<1x8x1xf32, #tpu.memory_space<vmem>>, vector<1x1x1xf32>
    %105 = vector.shape_cast %104 : vector<1x1x1xf32> to vector<1x1xf32>
    %106 = vector.shape_cast %85 : vector<1x1xf32> to vector<1x1x1xf32>
    tpu.vector_store %arg10[%c0_46, %c3_47, %c0_48], %106 {strides = array<i32>} : memref<1x8x1xf32, #tpu.memory_space<vmem>>, vector<1x1x1xf32>,
    %c0_49 = arith.constant 0 : index
    %c4 = arith.constant 4 : index
    %c0_50 = arith.constant 0 : index
    %107 = vector.load %arg10[%c0_49, %c4, %c0_50] : memref<1x8x1xf32, #tpu.memory_space<vmem>>, vector<1x3x1xf32>
    %108 = vector.shape_cast %107 : vector<1x3x1xf32> to vector<3x1xf32>
    %109 = vector.shape_cast %98 : vector<3x1xf32> to vector<1x3x1xf32>
    tpu.vector_store %arg10[%c0_49, %c4, %c0_50], %109 {strides = array<i32>} : memref<1x8x1xf32, #tpu.memory_space<vmem>>, vector<1x3x1xf32>,
    %c0_51 = arith.constant 0 : index
    %c7 = arith.constant 7 : index
    %c0_52 = arith.constant 0 : index
    %110 = vector.load %arg10[%c0_51, %c7, %c0_52] : memref<1x8x1xf32, #tpu.memory_space<vmem>>, vector<1x1x1xf32>
    %111 = vector.shape_cast %110 : vector<1x1x1xf32> to vector<1x1xf32>
    %112 = vector.shape_cast %100 : vector<1x1xf32> to vector<1x1x1xf32>
    tpu.vector_store %arg10[%c0_51, %c7, %c0_52], %112 {strides = array<i32>} : memref<1x8x1xf32, #tpu.memory_space<vmem>>, vector<1x1x1xf32>,
    return
  }
  func.func @transform_0(%arg0: i32) -> (i32, i32, i32) {
    %c0_i32 = arith.constant 0 : i32
    %c0_i32_0 = arith.constant 0 : i32
    %c0_i32_1 = arith.constant 0 : i32
    return %arg0, %c0_i32, %c0_i32_0 : i32, i32, i32
  }
  func.func @transform_1(%arg0: i32) -> (i32, i32) {
    %c0_i32 = arith.constant 0 : i32
    %c0_i32_0 = arith.constant 0 : i32
    %c0_i32_1 = arith.constant 0 : i32
    return %c0_i32, %c0_i32_0 : i32, i32
  }
  func.func @transform_2(%arg0: i32) -> (i32, i32) {
    %c0_i32 = arith.constant 0 : i32
    %c0_i32_0 = arith.constant 0 : i32
    %c0_i32_1 = arith.constant 0 : i32
    return %c0_i32, %c0_i32_0 : i32, i32
  }
  func.func @transform_3(%arg0: i32) -> (i32, i32, i32) {
    %c0_i32 = arith.constant 0 : i32
    %c0_i32_0 = arith.constant 0 : i32
    %c0_i32_1 = arith.constant 0 : i32
    return %arg0, %c0_i32, %c0_i32_0 : i32, i32, i32
  }
  func.func @transform_4(%arg0: i32) -> (i32, i32, i32) {
    %c0_i32 = arith.constant 0 : i32
    %c0_i32_0 = arith.constant 0 : i32
    %c0_i32_1 = arith.constant 0 : i32
    return %arg0, %c0_i32, %c0_i32_0 : i32, i32, i32
  }
  func.func @transform_5(%arg0: i32) -> (i32, i32, i32) {
    %c0_i32 = arith.constant 0 : i32
    %c0_i32_0 = arith.constant 0 : i32
    %c0_i32_1 = arith.constant 0 : i32
    return %arg0, %c0_i32, %c0_i32_0 : i32, i32, i32
  }
  func.func @transform_6(%arg0: i32) -> (i32, i32, i32) {
    %c0_i32 = arith.constant 0 : i32
    %c0_i32_0 = arith.constant 0 : i32
    %c0_i32_1 = arith.constant 0 : i32
    return %arg0, %c0_i32, %c0_i32_0 : i32, i32, i32
  }
  func.func @transform_7(%arg0: i32) -> (i32, i32, i32) {
    %c0_i32 = arith.constant 0 : i32
    %c0_i32_0 = arith.constant 0 : i32
    %c0_i32_1 = arith.constant 0 : i32
    return %arg0, %c0_i32, %c0_i32_0 : i32, i32, i32
  }
  func.func @transform_8(%arg0: i32) -> (i32, i32, i32) {
    %c0_i32 = arith.constant 0 : i32
    %c0_i32_0 = arith.constant 0 : i32
    %c0_i32_1 = arith.constant 0 : i32
    return %arg0, %c0_i32, %c0_i32_0 : i32, i32, i32
  }
  func.func @transform_9(%arg0: i32) -> (i32, i32, i32) {
    %c0_i32 = arith.constant 0 : i32
    %c0_i32_0 = arith.constant 0 : i32
    %c0_i32_1 = arith.constant 0 : i32
    return %arg0, %c0_i32, %c0_i32_0 : i32, i32, i32
  }
}

</mosaic_0001>

<llo_original>
// kernel: tpu_custom_call.1
$region0: #{tpu_custom_call.1}
  #allocation0 [shape = 'u32[]', space=smem, size = 0x4, offset = 0x4, fixed_abs, tag = 'smem constant byte address 0x4 - core index']
  #allocation1 [shape = 'u32[144,128]{1,0:T(1,128)}', space=vmem, size = 0x12000, scoped, tag = 'internal scratch']
  %s0 = inlined_call_operand.vmem [shape: bf16[2,32,8], index: 0, kind: input, shape index: {}]
  %s1 = inlined_call_operand.vmem [shape: bf16[14,32], index: 1, kind: input, shape index: {}]
  %s2 = inlined_call_operand.vmem [shape: f32[14,1], index: 2, kind: input, shape index: {}]
  %s3 = inlined_call_operand.vmem [shape: f32[2,6,8], index: 3, kind: input, shape index: {}]
  %s4 = inlined_call_operand.vmem [shape: f32[2,3,8], index: 4, kind: input, shape index: {}]
  %s5 = inlined_call_operand.vmem [shape: f32[2,8,1], index: 5, kind: input, shape index: {}]
  %s6 = inlined_call_operand.vmem [shape: f32[2,3,8], index: 6, kind: input, shape index: {}]
  %s7 = inlined_call_operand.vmem [shape: f32[2,6,8], index: 7, kind: output, shape index: {0}]
  %s8 = inlined_call_operand.hbm [shape: f32[2,8,8], index: 8, kind: output, shape index: {1}]
  %s9 = inlined_call_operand.vmem [shape: f32[2,8,1], index: 9, kind: output, shape index: {2}]
  %10 = xla_tuple %s7, %s8, %s9
  %s11 = sld [smem:[#allocation0]]
  $region77: #{tpu_custom_call.1} parent=0
    _
  %s13 = ssub.s32 1, %s11
  %s14 = scalar_select 0, %s13, %s11
  $region1: #{tpu_custom_call.1} parent=0
    #allocation2 [shape = 'u8[8192]{0}', space=vmem, size = 0x2000, scoped, tag = 'output window, operand 1']
    #allocation3 [shape = 's32[2]{0}', space=sflag, size = 0x8, scoped, tag = 'scoped memory for tpu_custom_call.1']
    %15 = vsyncpa [#allocation3], 0
    %s16 = scalar_lea.sflag [#allocation3], 1
    %17 = vsyncpa %s16, 0
    loop: start=0, step=1, limit=4
    $region2: #{tpu_custom_call.1} parent=1 // loop_pre_header
      _
    $region3: #{tpu_custom_call.1} parent=1 // loop_header
      %s19 = sphi 0, %s23
      %p20 = scmp.ge.s32.totalorder %s19, 4
      %s29 = sphi 0, %s31
      %s32 = sphi 0, %s29
      %s33 = sphi 0, %s32
      %s49 = sphi 0, %s33
      %s53 = sphi 0, %s53
      %s55 = sphi 0, %s53
      %s56 = sphi 0, %s55
      %s70 = sphi 0, %s56
      %s74 = sphi 0, %s74
      %s76 = sphi 0, %s74
      %s77 = sphi 0, %s76
      %s91 = sphi 0, %s77
      %s97 = sphi 0, %s99
      %s100 = sphi 0, %s97
      %s101 = sphi 0, %s100
      %s117 = sphi 0, %s101
      %s123 = sphi 0, %s125
      %s126 = sphi 0, %s123
      %s127 = sphi 0, %s126
      %s143 = sphi 0, %s127
      %s149 = sphi 0, %s151
      %s152 = sphi 0, %s149
      %s153 = sphi 0, %s152
      %s169 = sphi 0, %s153
      %s175 = sphi 0, %s177
      %s178 = sphi 0, %s175
      %s179 = sphi 0, %s178
      %s195 = sphi 0, %s179
      %s201 = sphi 0, %s203
      %s204 = sphi 0, %s201
      %s205 = sphi 0, %s204
      %s221 = sphi 0, %s205
      %s227 = sphi 0, %s229
      %s230 = sphi 0, %s227
      %s231 = sphi 0, %s230
      %s247 = sphi 0, %s231
      %s253 = sphi 0, %s255
      %s256 = sphi 0, %s253
      %s257 = sphi 0, %s256
      %s273 = sphi 0, %s257
    $region4: #{tpu_custom_call.1} parent=1 // loop_header_branch
      %22 = sbr.rel (%p20) target = $region8
    $region5: #{tpu_custom_call.1} parent=1 // loop_body
      %s24 = ssub.s32 %s19, 1
      %s25 = ssub.s32 %s19, 2
      %s26 = sadd.s32 %s19, 1
      %s27 = ssub.s32 %s19, %s26
      %p28 = scmp.eq.s32.totalorder %s27, 0
      %s30 = sadd.s32 %s29, 1
      %s31 = scalar_select %p28, %s29, %s30
      %p34 = pneg %p28
      %p35 = scmp.eq.s32.totalorder %s19, 1
      %p36 = por %p34, %p35
      %p37 = scmp.ne.s32.totalorder %s29, %s32
      %p38 = scmp.eq.s32.totalorder %s19, 0
      %p39 = por %p37, %p38
      %p40 = scmp.ne.s32.totalorder %s29, %s32
      %p41 = scmp.eq.s32.totalorder %s24, 1
      %p42 = por %p40, %p41
      %p43 = scmp.ne.s32.totalorder %s32, %s33
      %p44 = scmp.eq.s32.totalorder %s24, 0
      %p45 = por %p43, %p44
      %p46 = scmp.ne.s32.totalorder %s32, %s33
      %p47 = scmp.eq.s32.totalorder %s25, 1
      %p48 = por %p46, %p47
      %p50 = scmp.ne.s32.totalorder %s33, %s49
      %p51 = scmp.eq.s32.totalorder %s25, 0
      %p52 = por %p50, %p51
      %s54 = sadd.s32 %s53, 1
      %p57 = scmp.eq.s32.totalorder %s19, 1
      %p58 = scmp.ne.s32.totalorder %s53, %s55
      %p59 = scmp.eq.s32.totalorder %s19, 0
      %p60 = por %p58, %p59
      %p61 = scmp.ne.s32.totalorder %s53, %s55
      %p62 = scmp.eq.s32.totalorder %s24, 1
      %p63 = por %p61, %p62
      %p64 = scmp.ne.s32.totalorder %s55, %s56
      %p65 = scmp.eq.s32.totalorder %s24, 0
      %p66 = por %p64, %p65
      %p67 = scmp.ne.s32.totalorder %s55, %s56
      %p68 = scmp.eq.s32.totalorder %s25, 1
      %p69 = por %p67, %p68
      %p71 = scmp.ne.s32.totalorder %s56, %s70
      %p72 = scmp.eq.s32.totalorder %s25, 0
      %p73 = por %p71, %p72
      %s75 = sadd.s32 %s74, 1
      %p78 = scmp.eq.s32.totalorder %s19, 1
      %p79 = scmp.ne.s32.totalorder %s74, %s76
      %p80 = scmp.eq.s32.totalorder %s19, 0
      %p81 = por %p79, %p80
      %p82 = scmp.ne.s32.totalorder %s74, %s76
      %p83 = scmp.eq.s32.totalorder %s24, 1
      %p84 = por %p82, %p83
      %p85 = scmp.ne.s32.totalorder %s76, %s77
      %p86 = scmp.eq.s32.totalorder %s24, 0
      %p87 = por %p85, %p86
      %p88 = scmp.ne.s32.totalorder %s76, %s77
      %p89 = scmp.eq.s32.totalorder %s25, 1
      %p90 = por %p88, %p89
      %p92 = scmp.ne.s32.totalorder %s77, %s91
      %p93 = scmp.eq.s32.totalorder %s25, 0
      %p94 = por %p92, %p93
      %s95 = ssub.s32 %s19, %s26
      %p96 = scmp.eq.s32.totalorder %s95, 0
      %s98 = sadd.s32 %s97, 1
      %s99 = scalar_select %p96, %s97, %s98
      %p102 = pneg %p96
      %p103 = scmp.eq.s32.totalorder %s19, 1
      %p104 = por %p102, %p103
      %p105 = scmp.ne.s32.totalorder %s97, %s100
      %p106 = scmp.eq.s32.totalorder %s19, 0
      %p107 = por %p105, %p106
      %p108 = scmp.ne.s32.totalorder %s97, %s100
      %p109 = scmp.eq.s32.totalorder %s24, 1
      %p110 = por %p108, %p109
      %p111 = scmp.ne.s32.totalorder %s100, %s101
      %p112 = scmp.eq.s32.totalorder %s24, 0
      %p113 = por %p111, %p112
      %p114 = scmp.ne.s32.totalorder %s100, %s101
      %p115 = scmp.eq.s32.totalorder %s25, 1
      %p116 = por %p114, %p115
      %p118 = scmp.ne.s32.totalorder %s101, %s117
      %p119 = scmp.eq.s32.totalorder %s25, 0
      %p120 = por %p118, %p119
      %s121 = ssub.s32 %s19, %s26
      %p122 = scmp.eq.s32.totalorder %s121, 0
      %s124 = sadd.s32 %s123, 1
      %s125 = scalar_select %p122, %s123, %s124
      %p128 = pneg %p122
      %p129 = scmp.eq.s32.totalorder %s19, 1
      %p130 = por %p128, %p129
      %p131 = scmp.ne.s32.totalorder %s123, %s126
      %p132 = scmp.eq.s32.totalorder %s19, 0
      %p133 = por %p131, %p132
      %p134 = scmp.ne.s32.totalorder %s123, %s126
      %p135 = scmp.eq.s32.totalorder %s24, 1
      %p136 = por %p134, %p135
      %p137 = scmp.ne.s32.totalorder %s126, %s127
      %p138 = scmp.eq.s32.totalorder %s24, 0
      %p139 = por %p137, %p138
      %p140 = scmp.ne.s32.totalorder %s126, %s127
      %p141 = scmp.eq.s32.totalorder %s25, 1
      %p142 = por %p140, %p141
      %p144 = scmp.ne.s32.totalorder %s127, %s143
      %p145 = scmp.eq.s32.totalorder %s25, 0
      %p146 = por %p144, %p145
      %s147 = ssub.s32 %s19, %s26
      %p148 = scmp.eq.s32.totalorder %s147, 0
      %s150 = sadd.s32 %s149, 1
      %s151 = scalar_select %p148, %s149, %s150
      %p154 = pneg %p148
      %p155 = scmp.eq.s32.totalorder %s19, 1
      %p156 = por %p154, %p155
      %p157 = scmp.ne.s32.totalorder %s149, %s152
      %p158 = scmp.eq.s32.totalorder %s19, 0
      %p159 = por %p157, %p158
      %p160 = scmp.ne.s32.totalorder %s149, %s152
      %p161 = scmp.eq.s32.totalorder %s24, 1
      %p162 = por %p160, %p161
      %p163 = scmp.ne.s32.totalorder %s152, %s153
      %p164 = scmp.eq.s32.totalorder %s24, 0
      %p165 = por %p163, %p164
      %p166 = scmp.ne.s32.totalorder %s152, %s153
      %p167 = scmp.eq.s32.totalorder %s25, 1
      %p168 = por %p166, %p167
      %p170 = scmp.ne.s32.totalorder %s153, %s169
      %p171 = scmp.eq.s32.totalorder %s25, 0
      %p172 = por %p170, %p171
      %s173 = ssub.s32 %s19, %s26
      %p174 = scmp.eq.s32.totalorder %s173, 0
      %s176 = sadd.s32 %s175, 1
      %s177 = scalar_select %p174, %s175, %s176
      %p180 = pneg %p174
      %p181 = scmp.eq.s32.totalorder %s19, 1
      %p182 = por %p180, %p181
      %p183 = scmp.ne.s32.totalorder %s175, %s178
      %p184 = scmp.eq.s32.totalorder %s19, 0
      %p185 = por %p183, %p184
      %p186 = scmp.ne.s32.totalorder %s175, %s178
      %p187 = scmp.eq.s32.totalorder %s24, 1
      %p188 = por %p186, %p187
      %p189 = scmp.ne.s32.totalorder %s178, %s179
      %p190 = scmp.eq.s32.totalorder %s24, 0
      %p191 = por %p189, %p190
      %p192 = scmp.ne.s32.totalorder %s178, %s179
      %p193 = scmp.eq.s32.totalorder %s25, 1
      %p194 = por %p192, %p193
      %p196 = scmp.ne.s32.totalorder %s179, %s195
      %p197 = scmp.eq.s32.totalorder %s25, 0
      %p198 = por %p196, %p197
      %s199 = ssub.s32 %s19, %s26
      %p200 = scmp.eq.s32.totalorder %s199, 0
      %s202 = sadd.s32 %s201, 1
      %s203 = scalar_select %p200, %s201, %s202
      %p206 = pneg %p200
      %p207 = scmp.eq.s32.totalorder %s19, 1
      %p208 = por %p206, %p207
      %p209 = scmp.ne.s32.totalorder %s201, %s204
      %p210 = scmp.eq.s32.totalorder %s19, 0
      %p211 = por %p209, %p210
      %p212 = scmp.ne.s32.totalorder %s201, %s204
      %p213 = scmp.eq.s32.totalorder %s24, 1
      %p214 = por %p212, %p213
      %p215 = scmp.ne.s32.totalorder %s204, %s205
      %p216 = scmp.eq.s32.totalorder %s24, 0
      %p217 = por %p215, %p216
      %p218 = scmp.ne.s32.totalorder %s204, %s205
      %p219 = scmp.eq.s32.totalorder %s25, 1
      %p220 = por %p218, %p219
      %p222 = scmp.ne.s32.totalorder %s205, %s221
      %p223 = scmp.eq.s32.totalorder %s25, 0
      %p224 = por %p222, %p223
      %s225 = ssub.s32 %s19, %s26
      %p226 = scmp.eq.s32.totalorder %s225, 0
      %s228 = sadd.s32 %s227, 1
      %s229 = scalar_select %p226, %s227, %s228
      %p232 = pneg %p226
      %p233 = scmp.eq.s32.totalorder %s19, 1
      %p234 = por %p232, %p233
      %p235 = scmp.ne.s32.totalorder %s227, %s230
      %p236 = scmp.eq.s32.totalorder %s19, 0
      %p237 = por %p235, %p236
      %p238 = scmp.ne.s32.totalorder %s227, %s230
      %p239 = scmp.eq.s32.totalorder %s24, 1
      %p240 = por %p238, %p239
      %p241 = scmp.ne.s32.totalorder %s230, %s231
      %p242 = scmp.eq.s32.totalorder %s24, 0
      %p243 = por %p241, %p242
      %p244 = scmp.ne.s32.totalorder %s230, %s231
      %p245 = scmp.eq.s32.totalorder %s25, 1
      %p246 = por %p244, %p245
      %p248 = scmp.ne.s32.totalorder %s231, %s247
      %p249 = scmp.eq.s32.totalorder %s25, 0
      %p250 = por %p248, %p249
      %s251 = ssub.s32 %s19, %s26
      %p252 = scmp.eq.s32.totalorder %s251, 0
      %s254 = sadd.s32 %s253, 1
      %s255 = scalar_select %p252, %s253, %s254
      %p258 = pneg %p252
      %p259 = scmp.eq.s32.totalorder %s19, 1
      %p260 = por %p258, %p259
      %p261 = scmp.ne.s32.totalorder %s253, %s256
      %p262 = scmp.eq.s32.totalorder %s19, 0
      %p263 = por %p261, %p262
      %p264 = scmp.ne.s32.totalorder %s253, %s256
      %p265 = scmp.eq.s32.totalorder %s24, 1
      %p266 = por %p264, %p265
      %p267 = scmp.ne.s32.totalorder %s256, %s257
      %p268 = scmp.eq.s32.totalorder %s24, 0
      %p269 = por %p267, %p268
      %p270 = scmp.ne.s32.totalorder %s256, %s257
      %p271 = scmp.eq.s32.totalorder %s25, 1
      %p272 = por %p270, %p271
      %p274 = scmp.ne.s32.totalorder %s257, %s273
      %p275 = scmp.eq.s32.totalorder %s25, 0
      %p276 = por %p274, %p275
      %p277 = scmp.le.s32.totalorder 1, %s19
      %p278 = scmp.lt.s32.totalorder %s19, 3
      %p279 = pnand %p277, %p278
      %p280 = pneg %p279
      // Predicated region
      $region9: #{tpu_custom_call.1} parent=5 // pred_check
        _
      $region10: #{tpu_custom_call.1} parent=5 // pred_check_branch
        %282 = sbr.rel (%p279) target = $region12
      $region11: #{tpu_custom_call.1} parent=5 // pred_region
        %s283 = ssub.s32 %s19, 1
        // Predicated region
        $region13: #{tpu_custom_call.1} parent=11 // pred_check
          %p284 = pneg %p66
        $region14: #{tpu_custom_call.1} parent=11 // pred_check_branch
          %286 = sbr.rel (%p284) target = $region16
        $region15: #{tpu_custom_call.1} parent=11 // pred_region
          _
        $region16: #{tpu_custom_call.1} parent=11 // pred_fallthru
          _
        // Predicated region
        $region17: #{tpu_custom_call.1} parent=11 // pred_check
          %p287 = pneg %p87
        $region18: #{tpu_custom_call.1} parent=11 // pred_check_branch
          %289 = sbr.rel (%p287) target = $region20
        $region19: #{tpu_custom_call.1} parent=11 // pred_region
          _
        $region20: #{tpu_custom_call.1} parent=11 // pred_fallthru
          _
      $region12: #{tpu_custom_call.1} parent=5 // pred_fallthru
        _
      %p290 = scmp.lt.s32.totalorder %s19, 2
      // Predicated region
      $region21: #{tpu_custom_call.1} parent=5 // pred_check
        %p291 = pneg %p290
      $region22: #{tpu_custom_call.1} parent=5 // pred_check_branch
        %293 = sbr.rel (%p291) target = $region24
      $region23: #{tpu_custom_call.1} parent=5 // pred_region
        // Predicated region
        $region25: #{tpu_custom_call.1} parent=23 // pred_check
          %p294 = pneg %p39
        $region26: #{tpu_custom_call.1} parent=23 // pred_check_branch
          %296 = sbr.rel (%p294) target = $region28
        $region27: #{tpu_custom_call.1} parent=23 // pred_region
          %p297 = scmp.lt.s32.totalorder %s19, 1
          %s298 = scalar_select %p297, %s19, 1
          %s299 = smul.addr %s298, 4
          %s300 = smul.addr %s299, 4
          %s301 = scalar_lea.vmem %s0, %s300
        $region28: #{tpu_custom_call.1} parent=23 // pred_fallthru
          _
        // Predicated region
        $region29: #{tpu_custom_call.1} parent=23 // pred_check
          %p302 = pneg %p107
        $region30: #{tpu_custom_call.1} parent=23 // pred_check_branch
          %304 = sbr.rel (%p302) target = $region32
        $region31: #{tpu_custom_call.1} parent=23 // pred_region
          %p305 = scmp.lt.s32.totalorder %s19, 1
          %s306 = scalar_select %p305, %s19, 1
          %s307 = smul.addr %s306, 8
          %s308 = scalar_lea.vmem %s3, %s307
        $region32: #{tpu_custom_call.1} parent=23 // pred_fallthru
          _
        // Predicated region
        $region33: #{tpu_custom_call.1} parent=23 // pred_check
          %p309 = pneg %p133
        $region34: #{tpu_custom_call.1} parent=23 // pred_check_branch
          %311 = sbr.rel (%p309) target = $region36
        $region35: #{tpu_custom_call.1} parent=23 // pred_region
          %p312 = scmp.lt.s32.totalorder %s19, 1
          %s313 = scalar_select %p312, %s19, 1
          %s314 = smul.addr %s313, 4
          %s315 = scalar_lea.vmem %s4, %s314
        $region36: #{tpu_custom_call.1} parent=23 // pred_fallthru
          _
        // Predicated region
        $region37: #{tpu_custom_call.1} parent=23 // pred_check
          %p316 = pneg %p159
        $region38: #{tpu_custom_call.1} parent=23 // pred_check_branch
          %318 = sbr.rel (%p316) target = $region40
        $region39: #{tpu_custom_call.1} parent=23 // pred_region
          %p319 = scmp.lt.s32.totalorder %s19, 1
          %s320 = scalar_select %p319, %s19, 1
          %s321 = smul.addr %s320, 8
          %s322 = scalar_lea.vmem %s5, %s321
        $region40: #{tpu_custom_call.1} parent=23 // pred_fallthru
          _
        // Predicated region
        $region41: #{tpu_custom_call.1} parent=23 // pred_check
          %p323 = pneg %p185
        $region42: #{tpu_custom_call.1} parent=23 // pred_check_branch
          %325 = sbr.rel (%p323) target = $region44
        $region43: #{tpu_custom_call.1} parent=23 // pred_region
          %p326 = scmp.lt.s32.totalorder %s19, 1
          %s327 = scalar_select %p326, %s19, 1
          %s328 = smul.addr %s327, 4
          %s329 = scalar_lea.vmem %s6, %s328
        $region44: #{tpu_custom_call.1} parent=23 // pred_fallthru
          _
      $region24: #{tpu_custom_call.1} parent=5 // pred_fallthru
        _
      %p330 = scmp.le.s32.totalorder 1, %s19
      %p331 = scmp.lt.s32.totalorder %s19, 3
      %p332 = pnand %p330, %p331
      %p333 = pneg %p332
      // Predicated region
      $region45: #{tpu_custom_call.1} parent=5 // pred_check
        _
      $region46: #{tpu_custom_call.1} parent=5 // pred_check_branch
        %335 = sbr.rel (%p332) target = $region48
      $region47: #{tpu_custom_call.1} parent=5 // pred_region
        %s336 = ssub.s32 %s19, 1
        %p337 = scmp.lt.s32.totalorder %s24, 1
        %s338 = scalar_select %p337, %s24, 1
        %s339 = smul.addr %s338, 4
        %s340 = smul.addr %s339, 4
        %s341 = scalar_lea.vmem %s0, %s340
        %p342 = pneg %p45
        %p343 = pneg %p42
        %p344 = pneg %p66
        %p345 = pneg %p63
        %p346 = pneg %p87
        %p347 = pneg %p84
        %p348 = scmp.lt.s32.totalorder %s24, 1
        %s349 = scalar_select %p348, %s24, 1
        %s350 = smul.addr %s349, 8
        %s351 = scalar_lea.vmem %s3, %s350
        %p352 = pneg %p113
        %p353 = pneg %p110
        %p354 = scmp.lt.s32.totalorder %s24, 1
        %s355 = scalar_select %p354, %s24, 1
        %s356 = smul.addr %s355, 4
        %s357 = scalar_lea.vmem %s4, %s356
        %p358 = pneg %p139
        %p359 = pneg %p136
        %p360 = scmp.lt.s32.totalorder %s24, 1
        %s361 = scalar_select %p360, %s24, 1
        %s362 = smul.addr %s361, 8
        %s363 = scalar_lea.vmem %s5, %s362
        %p364 = pneg %p165
        %p365 = pneg %p162
        %p366 = scmp.lt.s32.totalorder %s24, 1
        %s367 = scalar_select %p366, %s24, 1
        %s368 = smul.addr %s367, 4
        %s369 = scalar_lea.vmem %s6, %s368
        %p370 = pneg %p191
        %p371 = pneg %p188
        %p372 = pneg %p217
        %p373 = pneg %p214
        %p374 = scmp.lt.s32.totalorder %s24, 1
        %s375 = scalar_select %p374, %s24, 1
        %s376 = smul.addr %s375, 8
        %s377 = scalar_lea.vmem %s7, %s376
        %p378 = pneg %p243
        %p379 = pneg %p240
        %s380 = sand.u32 %s230, 1
        %s381 = scalar_lea.sflag [#allocation3], %s380
        %s382 = sand.u32 %s230, 1
        %s383 = smul.addr %s382, 8
        %s384 = scalar_lea.vmem [#allocation2], %s383
        %p385 = pneg %p269
        %p386 = pneg %p266
        %p387 = scmp.lt.s32.totalorder %s24, 1
        %s388 = scalar_select %p387, %s24, 1
        %s389 = smul.addr %s388, 8
        %s390 = scalar_lea.vmem %s9, %s389
        %p391 = scmp.lt.s32.totalorder %s24, 1
        %s392 = scalar_select %p391, %s24, 1
        %s393 = smul.addr %s392, 4
        %s394 = smul.addr %s393, 4
        %s395 = scalar_lea.vmem %s0, %s394
        %p396 = scmp.lt.s32.totalorder %s24, 1
        %s397 = scalar_select %p396, %s24, 1
        %s398 = smul.addr %s397, 8
        %s399 = scalar_lea.vmem %s3, %s398
        %p400 = scmp.lt.s32.totalorder %s24, 1
        %s401 = scalar_select %p400, %s24, 1
        %s402 = smul.addr %s401, 4
        %s403 = scalar_lea.vmem %s4, %s402
        %p404 = scmp.lt.s32.totalorder %s24, 1
        %s405 = scalar_select %p404, %s24, 1
        %s406 = smul.addr %s405, 8
        %s407 = scalar_lea.vmem %s5, %s406
        %p408 = scmp.lt.s32.totalorder %s24, 1
        %s409 = scalar_select %p408, %s24, 1
        %s410 = smul.addr %s409, 4
        %s411 = scalar_lea.vmem %s6, %s410
        %p412 = scmp.lt.s32.totalorder %s24, 1
        %s413 = scalar_select %p412, %s24, 1
        %s414 = smul.addr %s413, 8
        %s415 = scalar_lea.vmem %s7, %s414
        %p416 = scmp.lt.s32.totalorder %s24, 1
        %s417 = scalar_select %p416, %s24, 1
        %s418 = smul.addr %s417, 8
        %s419 = scalar_lea.vmem %s9, %s418
        %v421 = vld [vmem:[%s1] sm:$0xf]
        %v422 = vld [vmem:[%s1 + $0x4] sm:$0x7]
        %v423 = vld [vmem:[%s395] sm:$0xf]
        %v424 = vld [vmem:[%s395 + $0x4] sm:$0xf]
        %v425 = vld [vmem:[%s395 + $0x8] sm:$0xf]
        %v426 = vld [vmem:[%s395 + $0xc] sm:$0xf]
        %v427 = vld [vmem:[%s2] sm:$0xff]
        %v428 = vld [vmem:[%s2 + $0x8] sm:$0x3f]
        %430 = vset.pattern.permute.xlu0 0
        %431 = vperm.xlu0 %430, %v427
        %v432 = vpop.permute.xlu0 %431
        %435 = vset.pattern.permute.xlu0 0
        %436 = vperm.xlu0 %435, %v428
        %v437 = vpop.permute.xlu0 %436
        %v441 = vunpack.c.l.b16 %v421
        %v442 = vunpack.c.l.b16 %v422
        %v443 = vpack.c.b16 %v442, %v441
        %v448 = vunpack.c.l.b16 %v423
        %v449 = vunpack.c.l.b16 %v424
        %v450 = vunpack.c.l.b16 %v425
        %v451 = vunpack.c.l.b16 %v426
        %v452 = vpack.c.b16 %v449, %v448
        %v453 = vpack.c.b16 %v451, %v450
        %vm456 = vcmask 261120
        %v458 = vsel %vm456, %v443, 0
        %460 = vmatprep.subr.bf16.mxu0 0
        %461 = vmatpush1.bf16.msra.mxu0 %v452
        %462 = vmatprep.subr.bf16.mxu0 0
        %463 = vmatpush1.bf16.msra.mxu0 %v453
        %464 = vmatprep.subr.bf16.mxu0 0
        %465 = vmatpush1.bf16.msra.mxu0 0
        %466 = vmatprep.subr.bf16.mxu0 0
        %467 = vmatpush1.bf16.msra.mxu0 0
        %468 = vmatprep.subr.bf16.mxu0 0
        %469 = vmatpush1.bf16.msra.mxu0 0
        %470 = vmatprep.subr.bf16.mxu0 0
        %471 = vmatpush1.bf16.msra.mxu0 0
        %472 = vmatprep.subr.bf16.mxu0 0
        %473 = vmatpush1.bf16.msra.mxu0 0
        %474 = vmatprep.subr.bf16.mxu0 0
        %475 = vmatpush1.bf16.msra.mxu0 0
        %476 = vmatprep.subr.bf16.mxu0 0
        %477 = vmatpush1.bf16.msra.mxu0 0
        %478 = vmatprep.subr.bf16.mxu0 0
        %479 = vmatpush1.bf16.msra.mxu0 0
        %480 = vmatprep.subr.bf16.mxu0 0
        %481 = vmatpush1.bf16.msra.mxu0 0
        %482 = vmatprep.subr.bf16.mxu0 0
        %483 = vmatpush1.bf16.msra.mxu0 0
        %484 = vmatprep.subr.bf16.mxu0 0
        %485 = vmatpush1.bf16.msra.mxu0 0
        %486 = vmatprep.subr.bf16.mxu0 0
        %487 = vmatpush1.bf16.msra.mxu0 0
        %488 = vmatprep.subr.bf16.mxu0 0
        %489 = vmatpush1.bf16.msra.mxu0 0
        %490 = vmatprep.subr.bf16.mxu0 0
        %491 = vmatpush1.bf16.msra.mxu0 0
        %492 = vmatprep.mubr.bf16.mxu0 0
        %493 = vmatmul.mubr.bf16.gmra.mrb[0].mxu0 %v458
        %v494 = vpop.f32.mrb[0].mxu0
        %v495 = vadd.f32 %v432, %v494
        %v496 = vpop.f32.mrb[0].mxu0
        %v497 = vpop.f32.mrb[0].mxu0
        %v498 = vadd.f32 %v437, %v497
        %v499 = vpop.f32.mrb[0].mxu0
        %500 = vdwg.mxu0
        %v501 = vld [vmem:[%s399] sm:$0x3f]
        %vm502 = vcmp.gt.f32.partialorder %v501, 0.0
        %v503 = vsel %vm502, %v498, -1e+08
        %vm504 = vcmask 59392
        %v505 = vsel %vm504, %v503, -inf
        %506 = vmax.xlane.f32.xlu0 %v505
        %v507 = vpop.xlane.xlu0 %506
        %v508 = vsub.f32 %v503, %v507
        %v509 = vmul.f32 %v508, 1.442695
        %v510 = vpow.pop %v509
        %v511 = vsel %vm504, %v510, 0.0
        %512 = vadd.xlane.f32.xlu0 %v511
        %v513 = vpop.xlane.xlu0 %512
        %v514 = vlog2.pop %v513
        %v515 = vmul.f32 %v514, 0.6931472
        %v516 = vsub.f32 %v508, %v515
        %v517 = vrcp.pop %v513
        %v518 = vmul.f32 %v510, %v517
        %519 = vst.msk [vmem:[%s415] sm:$0x7] %vm504, %v518
        %v520 = vand.u32 2147483647, %v503
        %v521 = vsub.f32 0.0, %v520
        %v522 = vmul.f32 %v521, 1.442695
        %v523 = vpow.pop %v522
        %v524 = vadd.f32 %v523, 1.0
        %v525 = vmin.f32 %v503, 0.0
        %v526 = vmul.f32 %v525, 1.442695
        %v527 = vpow.pop %v526
        %v528 = vrcp.pop %v524
        %v529 = vmul.f32 %v527, %v528
        %vm530 = vcmask 62467
        %531 = vst.msk [vmem:[%s415] sm:$0x38] %vm530, %v529
        %vm532 = vcmask 64512
        %v533 = vsel %vm532, %v495, -inf
        %v534 = vrot.slane %v533, 4
        %v535 = vmax.f32 %v533, %v534
        %v536 = vrot.slane %v535, 2
        %v537 = vmax.f32 %v535, %v536
        %v538 = vrot.slane %v537, 1
        %v539 = vmax.f32 %v537, %v538
        %v540 = vsub.f32 %v495, %v539
        %v541 = vmul.f32 %v540, 1.442695
        %v542 = vpow.pop %v541
        %v543 = vsel %vm532, %v542, 0.0
        %v544 = vrot.slane %v543, 4
        %v545 = vadd.f32 %v543, %v544
        %v546 = vrot.slane %v545, 2
        %v547 = vadd.f32 %v545, %v546
        %v548 = vrot.slane %v547, 1
        %v549 = vadd.f32 %v547, %v548
        %v550 = vlog2.pop %v549
        %v551 = vmul.f32 %v550, 0.6931472
        %v552 = vsub.f32 %v540, %v551
        %v553 = vrcp.pop %v549
        %v554 = vmul.f32 %v542, %v553
        %555 = vst.msk [vmem:[%s384] sm:$0xff] %vm532, %v554
        %v556 = vld [vmem:[%s403] sm:$0x7]
        %v557 = vmul.f32 %v516, %v556
        %v558 = vsel %vm504, %v557, 0.0
        %559 = vadd.xlane.f32.xlu0 %v558
        %v560 = vpop.xlane.xlu0 %559
        %v561 = vsub.f32 0.0, %v560
        %v562 = vld [vmem:[%s407] sm:$0xff]
        %564 = vset.pattern.permute.xlu0 0
        %565 = vperm.xlu0 %564, %v562
        %v566 = vpop.permute.xlu0 %565
        %v568 = vmul.f32 %v552, %v566
        %v569 = vsel %vm532, %v568, 0.0
        %v570 = vrot.slane %v569, 4
        %v571 = vadd.f32 %v569, %v570
        %v572 = vrot.slane %v571, 2
        %v573 = vadd.f32 %v571, %v572
        %v574 = vrot.slane %v573, 1
        %v575 = vadd.f32 %v573, %v574
        %v576 = vmul.f32 %v575, %v556
        %vm577 = vcmask 57344
        %v578 = vsel %vm577, %v576, 0.0
        %579 = vadd.xlane.f32.xlu0 %v578
        %v580 = vpop.xlane.xlu0 %579
        %v581 = vsub.f32 0.0, %v580
        %v582 = vld [vmem:[%s411] sm:$0x7]
        %v583 = vmax.f32 %v503, 0.0
        %v585 = vrot.slane %v582, 5
        %v587 = vmul.f32 %v503, %v585
        %v588 = vsub.f32 %v583, %v587
        %v589 = vlog2.pop %v524
        %v590 = vmul.f32 %v589, 0.6931472
        %v591 = vadd.f32 %v588, %v590
        %v592 = vlaneseq
        %v593 = vshrl.u32 %v592, 7
        %v594 = vsub.s32 3, %v593
        %v595 = vrot.slane %v501, %v594
        %v596 = vmul.f32 %v591, %v595
        %v597 = vsel %vm530, %v596, 0.0
        %598 = vadd.xlane.f32.xlu0 %v597
        %v599 = vpop.xlane.xlu0 %598
        %vm600 = vcmask 60419
        %v601 = vsel %vm600, %v501, 0.0
        %602 = vadd.xlane.f32.xlu0 %v601
        %v603 = vpop.xlane.xlu0 %602
        %vm604 = vcmask 2048
        %605 = vst.msk [vmem:[%s419] sm:$0x7] %vm604, %v561
        %vm606 = vcmask 0
        %607 = vst.msk [vmem:[%s419 + $0x3] sm:$0x1] %vm606, %v581
        %vm608 = vcmask 5123
        %609 = vst.msk [vmem:[%s419 + $0x1] sm:$0x38] %vm608, %v599
        %vm610 = vcmask 3075
        %611 = vst.msk [vmem:[%s419 + $0x4] sm:$0x8] %vm610, %v603
        %p612 = scmp.lt.s32.totalorder %s24, 1
        %s613 = scalar_select %p612, %s24, 1
        %s614 = smul.addr %s613, 8
        %s615 = scalar_lea.vmem %s7, %s614
        %s616 = sand.u32 %s230, 1
        %s617 = scalar_lea.sflag [#allocation3], %s616
        %s618 = sand.u32 %s230, 1
        %s619 = smul.addr %s618, 8
        %s620 = scalar_lea.vmem [#allocation2], %s619
        %p621 = scmp.lt.s32.totalorder %s24, 1
        %s622 = scalar_select %p621, %s24, 1
        %s623 = smul.addr %s622, 8
        %s624 = scalar_lea.vmem %s9, %s623
        // Predicated region
        $region49: #{tpu_custom_call.1} parent=47 // pred_check
          %p625 = pneg %p214
        $region50: #{tpu_custom_call.1} parent=47 // pred_check_branch
          %627 = sbr.rel (%p625) target = $region52
        $region51: #{tpu_custom_call.1} parent=47 // pred_region
          _
        $region52: #{tpu_custom_call.1} parent=47 // pred_fallthru
          _
        // Predicated region
        $region53: #{tpu_custom_call.1} parent=47 // pred_check
          %p628 = pneg %p240
        $region54: #{tpu_custom_call.1} parent=47 // pred_check_branch
          %630 = sbr.rel (%p628) target = $region56
        $region55: #{tpu_custom_call.1} parent=47 // pred_region
          %s632 = ssub.s32 128, 128
          %633 = vsyncadd %s617, %s632
          %s634 = smul.addr %s24, 128
          %s635 = scalar_lea.hbm %s8, %s634
          %s637 = sshll.u32 %s620, 4
          %s638 = int_to_ptr.vmem [resolvable:$true] %s637
          %640 = dma.vmem_to_hbm [thread:$0]  %s638, 128, %s635, %s617
        $region56: #{tpu_custom_call.1} parent=47 // pred_fallthru
          _
        // Predicated region
        $region57: #{tpu_custom_call.1} parent=47 // pred_check
          %p641 = pneg %p266
        $region58: #{tpu_custom_call.1} parent=47 // pred_check_branch
          %643 = sbr.rel (%p641) target = $region60
        $region59: #{tpu_custom_call.1} parent=47 // pred_region
          _
        $region60: #{tpu_custom_call.1} parent=47 // pred_fallthru
          _
      $region48: #{tpu_custom_call.1} parent=5 // pred_fallthru
        _
      %p644 = scmp.le.s32.totalorder 2, %s19
      // Predicated region
      $region61: #{tpu_custom_call.1} parent=5 // pred_check
        %p645 = pneg %p644
      $region62: #{tpu_custom_call.1} parent=5 // pred_check_branch
        %647 = sbr.rel (%p645) target = $region64
      $region63: #{tpu_custom_call.1} parent=5 // pred_region
        %s648 = ssub.s32 %s19, 2
        // Predicated region
        $region65: #{tpu_custom_call.1} parent=63 // pred_check
          %p649 = pneg %p220
        $region66: #{tpu_custom_call.1} parent=63 // pred_check_branch
          %651 = sbr.rel (%p649) target = $region68
        $region67: #{tpu_custom_call.1} parent=63 // pred_region
          %p652 = scmp.lt.s32.totalorder %s25, 1
          %s653 = scalar_select %p652, %s25, 1
          %s654 = smul.addr %s653, 8
          %s655 = scalar_lea.vmem %s7, %s654
        $region68: #{tpu_custom_call.1} parent=63 // pred_fallthru
          _
        // Predicated region
        $region69: #{tpu_custom_call.1} parent=63 // pred_check
          %p656 = pneg %p246
        $region70: #{tpu_custom_call.1} parent=63 // pred_check_branch
          %658 = sbr.rel (%p656) target = $region72
        $region71: #{tpu_custom_call.1} parent=63 // pred_region
          %s659 = sand.u32 %s231, 1
          %s660 = scalar_lea.sflag [#allocation3], %s659
          %s661 = sand.u32 %s231, 1
          %s662 = smul.addr %s661, 8
          %s663 = scalar_lea.vmem [#allocation2], %s662
          %664 = dma.done %s660, 128
        $region72: #{tpu_custom_call.1} parent=63 // pred_fallthru
          _
        // Predicated region
        $region73: #{tpu_custom_call.1} parent=63 // pred_check
          %p665 = pneg %p272
        $region74: #{tpu_custom_call.1} parent=63 // pred_check_branch
          %667 = sbr.rel (%p665) target = $region76
        $region75: #{tpu_custom_call.1} parent=63 // pred_region
          %p668 = scmp.lt.s32.totalorder %s25, 1
          %s669 = scalar_select %p668, %s25, 1
          %s670 = smul.addr %s669, 8
          %s671 = scalar_lea.vmem %s9, %s670
        $region76: #{tpu_custom_call.1} parent=63 // pred_fallthru
          _
      $region64: #{tpu_custom_call.1} parent=5 // pred_fallthru
        _
    $region6: #{tpu_custom_call.1} parent=1 // loop_footer
      %s23 = sadd.s32 1, %s19
    $region7: #{tpu_custom_call.1} parent=1 // loop_footer_branch
      %18 = sbr.rel target = $region3
    $region8: #{tpu_custom_call.1} parent=1 // loop_exit
      _
    %672 = vsyncpa [#allocation3], 1
    %s673 = scalar_lea.sflag [#allocation3], 1
    %674 = vsyncpa %s673, 1

</llo_original>
